<compile_context>
chip_gen: v5e
topology: v5e:2x2
jax: 0.10.0
libtpu: 0.0.40
codegen_flags: <defaults>
</compile_context>

<pallas_src>
import jax
import jax.numpy as jnp
from jax.experimental import pallas as pl
from jax.experimental.pallas import tpu as pltpu

_INV_SQRT2 = 0.7071067811865476

# tap index k = (dy+1)*3 + (dx+1)  ->  row in the (8, H*W) boundary-mask operand
# (the center tap k=4 needs no mask)
_MASK_ROW = {0: 0, 1: 1, 2: 2, 3: 3, 5: 4, 6: 5, 7: 6, 8: 7}


def _make_kernel(H, W):
    HW = H * W

    def kernel(x_ref, p_ref, m_ref, o_ref):
        """Depthwise 3x3 conv + GELU + BN(eval) + residual on a lane-dense block.

        x_ref : (nb, cb, HW)  input block (also the residual source)
        p_ref : (12, cb, 1)   per-channel params: 9 conv taps, conv bias,
                              folded BN scale, folded BN bias
        m_ref : (8, HW)       per-tap 0/1 boundary masks on the flattened axis
        o_ref : (nb, cb, HW)  output block
        """
        x = x_ref[...].astype(jnp.float32)

        acc = None
        for dy in (-1, 0, 1):
            for dx in (-1, 0, 1):
                k = (dy + 1) * 3 + (dx + 1)
                shift = dy * W + dx                    # shifted[i] = x[i + shift]
                if shift == 0:
                    xs = x
                else:
                    xs = pltpu.roll(x, shift=(-shift) % HW, axis=2)
                wk = p_ref[k]                          # (cb, 1) per-channel tap weight
                if k == 4:
                    plane = wk                         # (cb, 1)
                else:
                    r = _MASK_ROW[k]
                    # fold the positional boundary mask into the weight plane:
                    # (cb, 1) * (1, HW) -> (cb, HW); only 1/nb of block-sized work.
                    plane = wk * m_ref[r:r + 1, :]
                term = xs * plane
                acc = term if acc is None else acc + term

        acc = acc + p_ref[9]                           # conv bias
        # exact (erf) GELU — matches nn.GELU() default semantics
        g = 0.5 * acc * (1.0 + jax.lax.erf(acc * _INV_SQRT2))
        y = g * p_ref[10] + p_ref[11]                  # eval-mode BatchNorm, folded
        # residual: re-read the input block (still resident in its VMEM buffer)
        o_ref[...] = (y + x_ref[...].astype(jnp.float32)).astype(o_ref.dtype)

    return kernel


def _vmem_limit_bytes():
    cap = None
    try:
        info = pltpu.get_tpu_info()
        for attr in ("vmem_capacity_bytes", "vmem_size_bytes", "vmem_bytes"):
            v = getattr(info, attr, None)
            if v:
                cap = int(v)
                break
    except Exception:
        cap = None
    if cap is None:
        cap = 64 * 1024 * 1024      # conservative fallback: v7x per-TensorCore VMEM
    # ~64 MiB scoped on 128 MiB parts (v5e/v6e), ~44 MiB on 64 MiB parts (v7x)
    return min(64 * 1024 * 1024, (cap * 7) // 10)


def _divisors(n):
    return [d for d in range(1, n + 1) if n % d == 0]


def _pick_tiles(N, C, H, W, x_itemsize, vmem_limit_bytes):
    """Largest padding-aware (nb, cb) divisor tiles fitting the VMEM budget,
    keeping >= 2 grid steps when possible (feeds both v7x TensorCores)."""
    HW = H * W
    hw_pad = -(-HW // 128) * 128                   # lane padding
    budget = int(vmem_limit_bytes * 0.9)

    def cpad(cb):
        return -(-cb // 8) * 8                     # sublane padding

    def footprint(nb, cb):
        blk = nb * cpad(cb) * hw_pad
        xin = blk * x_itemsize
        xout = blk * x_itemsize
        prm = 12 * cpad(cb) * 128 * 4              # (12,cb,1): (cb,1) pads to (cpad,128)
        msk = 8 * hw_pad * 4                       # (8, HW)
        tmp = 3 * blk * 4                          # in-kernel f32 temporaries
        return 2 * (xin + xout + prm + msk) + tmp  # x2: double-buffered pipeline

    cb_cands = [d for d in _divisors(C) if d % 8 == 0 or d == C]
    nb_cands = _divisors(N)
    cands = [(nb, cb) for nb in nb_cands for cb in cb_cands]
    fitting = [(nb, cb) for nb, cb in cands if footprint(nb, cb) <= budget]
    if not fitting:
        # TODO(synk): add an H-split grid axis (2-row halo) for planes that do not
        # fit VMEM even at the minimal (nb=1, cb=min) block (notably v7x's 64 MiB).
        return 1, min(cb_cands)
    multi = [(nb, cb) for nb, cb in fitting if (N // nb) * (C // cb) >= 2]
    pool = multi if multi else fitting
    nb, cb = max(pool, key=lambda t: (t[0] * cpad(t[1]), t[1]))
    return nb, cb


def residual_seam(x_nchw, w_dw, conv_bias, gamma, beta, run_mean, run_var, eps=1e-5):
    """Residual(depthwise3x3 -> GELU -> BN(eval)) on an NCHW tensor.

    x_nchw: (N, C, H, W).  w_dw: (C, 1, 3, 3) depthwise conv weight.
    """
    N, C, H, W = x_nchw.shape
    HW = H * W
    x_flat = x_nchw.reshape(N, C, HW)              # free: contiguous last-two-dim merge

    # ---- pack per-channel params: 9 taps + conv bias + folded BN scale/bias ------
    w9 = jnp.transpose(w_dw.reshape(C, 9), (1, 0))                 # (9, C), tap-major
    scale = gamma / jnp.sqrt(run_var + eps)                        # (C,)
    bias = beta - run_mean * scale                                 # (C,)
    params = jnp.concatenate(
        [w9, conv_bias[None, :], scale[None, :], bias[None, :]], axis=0
    ).astype(jnp.float32)[:, :, None]                              # (12, C, 1)

    # ---- 8 combined per-tap boundary masks on the flattened H*W axis -------------
    pos = jnp.arange(HW)
    h_idx = pos // W
    w_idx = pos % W
    rows = []
    for dy in (-1, 0, 1):
        for dx in (-1, 0, 1):
            if dy == 0 and dx == 0:
                continue
            ok = jnp.ones((HW,), dtype=bool)
            if dy == -1:
                ok = ok & (h_idx >= 1)
            if dy == 1:
                ok = ok & (h_idx <= H - 2)
            if dx == -1:
                ok = ok & (w_idx >= 1)
            if dx == 1:
                ok = ok & (w_idx <= W - 2)
            rows.append(ok)
    masks = jnp.stack(rows, axis=0).astype(jnp.float32)            # (8, HW)

    # ---- tiling -------------------------------------------------------------------
    vmem_limit = _vmem_limit_bytes()
    nb, cb = _pick_tiles(N, C, H, W, x_nchw.dtype.itemsize, vmem_limit)

    # channel axis outer, batch axis inner: params block index is constant along
    # the innermost axis, so it is not re-fetched every grid step.
    grid = (C // cb, N // nb)

    out = pl.pallas_call(
        _make_kernel(H, W),
        out_shape=jax.ShapeDtypeStruct((N, C, HW), x_nchw.dtype),
        grid_spec=pltpu.PrefetchScalarGridSpec(
            num_scalar_prefetch=0,
            grid=grid,
            in_specs=[
                pl.BlockSpec((nb, cb, HW), lambda c, b: (b, c, 0)),
                pl.BlockSpec((12, cb, 1), lambda c, b: (0, c, 0)),
                pl.BlockSpec((8, HW), lambda c, b: (0, 0)),
            ],
            out_specs=pl.BlockSpec((nb, cb, HW), lambda c, b: (b, c, 0)),
        ),
        compiler_params=pltpu.CompilerParams(
            dimension_semantics=("parallel", "parallel"),
            vmem_limit_bytes=vmem_limit,
        ),
    )(x_flat, params, masks)

    return out.reshape(N, C, H, W)


def _reference(x_nchw, w_dw, conv_bias, gamma, beta, run_mean, run_var, eps=1e-5):
    """Pure-JAX reference of Residual(depthwise3x3 -> GELU -> BN(eval))."""
    N, C, H, W = x_nchw.shape
    y = jax.lax.conv_general_dilated(
        x_nchw, w_dw, window_strides=(1, 1), padding=((1, 1), (1, 1)),
        dimension_numbers=("NCHW", "OIHW", "NCHW"), feature_group_count=C)
    y = y + conv_bias.reshape(1, C, 1, 1)
    y = 0.5 * y * (1.0 + jax.lax.erf(y * _INV_SQRT2))
    y = (y - run_mean.reshape(1, C, 1, 1)) / jnp.sqrt(run_var.reshape(1, C, 1, 1) + eps)
    y = y * gamma.reshape(1, C, 1, 1) + beta.reshape(1, C, 1, 1)
    return y + x_nchw


if __name__ == "__main__":
    N, C, H, W = 2, 4, 16, 16

    key = jax.random.PRNGKey(0)
    k_x, k_w, k_cb, k_g, k_b, k_m, k_v = jax.random.split(key, 7)

    x = jax.random.normal(k_x, (N, C, H, W), dtype=jnp.float32)

    # Deterministic synthetic parameters (shapes per nn.Conv2d / nn.BatchNorm2d).
    w_dw = 0.1 * jax.random.normal(k_w, (C, 1, 3, 3), dtype=jnp.float32)
    conv_bias = 0.05 * jax.random.normal(k_cb, (C,), dtype=jnp.float32)
    gamma = 1.0 + 0.1 * jax.random.normal(k_g, (C,), dtype=jnp.float32)
    beta = 0.1 * jax.random.normal(k_b, (C,), dtype=jnp.float32)
    run_mean = 0.1 * jax.random.normal(k_m, (C,), dtype=jnp.float32)
    run_var = jax.random.uniform(k_v, (C,), minval=0.5, maxval=1.5, dtype=jnp.float32)

    out = residual_seam(x, w_dw, conv_bias, gamma, beta, run_mean, run_var)
    out = jax.block_until_ready(out)

    ref = _reference(x, w_dw, conv_bias, gamma, beta, run_mean, run_var)
    ref = jax.block_until_ready(ref)

    assert out.shape == (N, C, H, W)
    err = float(jnp.max(jnp.abs(out - ref)))
    assert jnp.allclose(out, ref, atol=1e-4, rtol=1e-4), err

    print("KERNEL_OK")
</pallas_src>

<mosaic_0001>
module attributes {stable_mosaic.version = 11 : i64} {
  func.func @kernel(%arg0: i32, %arg1: i32, %arg2: memref<1x4x256xf32, #tpu.memory_space<vmem>>, %arg3: memref<12x4x1xf32, #tpu.memory_space<vmem>>, %arg4: memref<8x256xf32, #tpu.memory_space<vmem>>, %arg5: memref<1x4x256xf32, #tpu.memory_space<vmem>>) attributes {dimension_semantics = [#tpu.dimension_semantics<parallel>, #tpu.dimension_semantics<parallel>], iteration_bounds = array<i64: 1, 2>, scalar_prefetch = 0 : i64, scratch_operands = 0 : i64, tpu.core_type = #tpu.core_type<tc>, window_params = [{transform_indices = @transform_0, window_bounds = array<i64: 1, 4, 256>}, {transform_indices = @transform_1, window_bounds = array<i64: 12, 4, 1>}, {pipeline_mode = #tpu.pipeline_mode<synchronous>, transform_indices = @transform_2, window_bounds = array<i64: 8, 256>}, {transform_indices = @transform_3, window_bounds = array<i64: 1, 4, 256>}]} {
    %c0 = arith.constant 0 : index
    %c0_0 = arith.constant 0 : index
    %c0_1 = arith.constant 0 : index
    %0 = vector.load %arg2[%c0, %c0_0, %c0_1] : memref<1x4x256xf32, #tpu.memory_space<vmem>>, vector<1x4x256xf32>
    %c17_i32 = arith.constant 17 : i32
    %1 = tpu.dynamic_rotate %0 by %c17_i32 dim 2 : vector<1x4x256xf32>, i32 -> vector<1x4x256xf32>
    %c0_2 = arith.constant 0 : index
    %c0_3 = arith.constant 0 : index
    %c0_4 = arith.constant 0 : index
    %2 = vector.load %arg3[%c0_2, %c0_3, %c0_4] : memref<12x4x1xf32, #tpu.memory_space<vmem>>, vector<1x4x1xf32>
    %3 = vector.shape_cast %2 : vector<1x4x1xf32> to vector<4x1xf32>
    %c0_5 = arith.constant 0 : index
    %c0_6 = arith.constant 0 : index
    %4 = vector.load %arg4[%c0_5, %c0_6] : memref<8x256xf32, #tpu.memory_space<vmem>>, vector<1x256xf32>
    %5 = vector.broadcast %3 : vector<4x1xf32> to vector<4x256xf32>
    %6 = vector.broadcast %4 : vector<1x256xf32> to vector<4x256xf32>
    %7 = arith.mulf %5, %6 : vector<4x256xf32>
    %8 = vector.shape_cast %7 : vector<4x256xf32> to vector<1x4x256xf32>
    %9 = arith.mulf %1, %8 : vector<1x4x256xf32>
    %c16_i32 = arith.constant 16 : i32
    %10 = tpu.dynamic_rotate %0 by %c16_i32 dim 2 : vector<1x4x256xf32>, i32 -> vector<1x4x256xf32>
    %c1 = arith.constant 1 : index
    %c0_7 = arith.constant 0 : index
    %c0_8 = arith.constant 0 : index
    %11 = vector.load %arg3[%c1, %c0_7, %c0_8] : memref<12x4x1xf32, #tpu.memory_space<vmem>>, vector<1x4x1xf32>
    %12 = vector.shape_cast %11 : vector<1x4x1xf32> to vector<4x1xf32>
    %c1_9 = arith.constant 1 : index
    %c0_10 = arith.constant 0 : index
    %13 = vector.load %arg4[%c1_9, %c0_10] : memref<8x256xf32, #tpu.memory_space<vmem>>, vector<1x256xf32>
    %14 = vector.broadcast %12 : vector<4x1xf32> to vector<4x256xf32>
    %15 = vector.broadcast %13 : vector<1x256xf32> to vector<4x256xf32>
    %16 = arith.mulf %14, %15 : vector<4x256xf32>
    %17 = vector.shape_cast %16 : vector<4x256xf32> to vector<1x4x256xf32>
    %18 = arith.mulf %10, %17 : vector<1x4x256xf32>
    %19 = arith.addf %9, %18 : vector<1x4x256xf32>
    %c15_i32 = arith.constant 15 : i32
    %20 = tpu.dynamic_rotate %0 by %c15_i32 dim 2 : vector<1x4x256xf32>, i32 -> vector<1x4x256xf32>
    %c2 = arith.constant 2 : index
    %c0_11 = arith.constant 0 : index
    %c0_12 = arith.constant 0 : index
    %21 = vector.load %arg3[%c2, %c0_11, %c0_12] : memref<12x4x1xf32, #tpu.memory_space<vmem>>, vector<1x4x1xf32>
    %22 = vector.shape_cast %21 : vector<1x4x1xf32> to vector<4x1xf32>
    %c2_13 = arith.constant 2 : index
    %c0_14 = arith.constant 0 : index
    %23 = vector.load %arg4[%c2_13, %c0_14] : memref<8x256xf32, #tpu.memory_space<vmem>>, vector<1x256xf32>
    %24 = vector.broadcast %22 : vector<4x1xf32> to vector<4x256xf32>
    %25 = vector.broadcast %23 : vector<1x256xf32> to vector<4x256xf32>
    %26 = arith.mulf %24, %25 : vector<4x256xf32>
    %27 = vector.shape_cast %26 : vector<4x256xf32> to vector<1x4x256xf32>
    %28 = arith.mulf %20, %27 : vector<1x4x256xf32>
    %29 = arith.addf %19, %28 : vector<1x4x256xf32>
    %c1_i32 = arith.constant 1 : i32
    %30 = tpu.dynamic_rotate %0 by %c1_i32 dim 2 : vector<1x4x256xf32>, i32 -> vector<1x4x256xf32>
    %c3 = arith.constant 3 : index
    %c0_15 = arith.constant 0 : index
    %c0_16 = arith.constant 0 : index
    %31 = vector.load %arg3[%c3, %c0_15, %c0_16] : memref<12x4x1xf32, #tpu.memory_space<vmem>>, vector<1x4x1xf32>
    %32 = vector.shape_cast %31 : vector<1x4x1xf32> to vector<4x1xf32>
    %c3_17 = arith.constant 3 : index
    %c0_18 = arith.constant 0 : index
    %33 = vector.load %arg4[%c3_17, %c0_18] : memref<8x256xf32, #tpu.memory_space<vmem>>, vector<1x256xf32>
    %34 = vector.broadcast %32 : vector<4x1xf32> to vector<4x256xf32>
    %35 = vector.broadcast %33 : vector<1x256xf32> to vector<4x256xf32>
    %36 = arith.mulf %34, %35 : vector<4x256xf32>
    %37 = vector.shape_cast %36 : vector<4x256xf32> to vector<1x4x256xf32>
    %38 = arith.mulf %30, %37 : vector<1x4x256xf32>
    %39 = arith.addf %29, %38 : vector<1x4x256xf32>
    %c4 = arith.constant 4 : index
    %c0_19 = arith.constant 0 : index
    %c0_20 = arith.constant 0 : index
    %40 = vector.load %arg3[%c4, %c0_19, %c0_20] : memref<12x4x1xf32, #tpu.memory_space<vmem>>, vector<1x4x1xf32>
    %41 = vector.shape_cast %40 : vector<1x4x1xf32> to vector<4x1xf32>
    %42 = vector.shape_cast %41 : vector<4x1xf32> to vector<1x4x1xf32>
    %43 = vector.broadcast %42 : vector<1x4x1xf32> to vector<1x4x256xf32>
    %44 = arith.mulf %0, %43 : vector<1x4x256xf32>
    %45 = arith.addf %39, %44 : vector<1x4x256xf32>
    %c255_i32 = arith.constant 255 : i32
    %46 = tpu.dynamic_rotate %0 by %c255_i32 dim 2 : vector<1x4x256xf32>, i32 -> vector<1x4x256xf32>
    %c5 = arith.constant 5 : index
    %c0_21 = arith.constant 0 : index
    %c0_22 = arith.constant 0 : index
    %47 = vector.load %arg3[%c5, %c0_21, %c0_22] : memref<12x4x1xf32, #tpu.memory_space<vmem>>, vector<1x4x1xf32>
    %48 = vector.shape_cast %47 : vector<1x4x1xf32> to vector<4x1xf32>
    %c4_23 = arith.constant 4 : index
    %c0_24 = arith.constant 0 : index
    %49 = vector.load %arg4[%c4_23, %c0_24] : memref<8x256xf32, #tpu.memory_space<vmem>>, vector<1x256xf32>
    %50 = vector.broadcast %48 : vector<4x1xf32> to vector<4x256xf32>
    %51 = vector.broadcast %49 : vector<1x256xf32> to vector<4x256xf32>
    %52 = arith.mulf %50, %51 : vector<4x256xf32>
    %53 = vector.shape_cast %52 : vector<4x256xf32> to vector<1x4x256xf32>
    %54 = arith.mulf %46, %53 : vector<1x4x256xf32>
    %55 = arith.addf %45, %54 : vector<1x4x256xf32>
    %c241_i32 = arith.constant 241 : i32
    %56 = tpu.dynamic_rotate %0 by %c241_i32 dim 2 : vector<1x4x256xf32>, i32 -> vector<1x4x256xf32>
    %c6 = arith.constant 6 : index
    %c0_25 = arith.constant 0 : index
    %c0_26 = arith.constant 0 : index
    %57 = vector.load %arg3[%c6, %c0_25, %c0_26] : memref<12x4x1xf32, #tpu.memory_space<vmem>>, vector<1x4x1xf32>
    %58 = vector.shape_cast %57 : vector<1x4x1xf32> to vector<4x1xf32>
    %c5_27 = arith.constant 5 : index
    %c0_28 = arith.constant 0 : index
    %59 = vector.load %arg4[%c5_27, %c0_28] : memref<8x256xf32, #tpu.memory_space<vmem>>, vector<1x256xf32>
    %60 = vector.broadcast %58 : vector<4x1xf32> to vector<4x256xf32>
    %61 = vector.broadcast %59 : vector<1x256xf32> to vector<4x256xf32>
    %62 = arith.mulf %60, %61 : vector<4x256xf32>
    %63 = vector.shape_cast %62 : vector<4x256xf32> to vector<1x4x256xf32>
    %64 = arith.mulf %56, %63 : vector<1x4x256xf32>
    %65 = arith.addf %55, %64 : vector<1x4x256xf32>
    %c240_i32 = arith.constant 240 : i32
    %66 = tpu.dynamic_rotate %0 by %c240_i32 dim 2 : vector<1x4x256xf32>, i32 -> vector<1x4x256xf32>
    %c7 = arith.constant 7 : index
    %c0_29 = arith.constant 0 : index
    %c0_30 = arith.constant 0 : index
    %67 = vector.load %arg3[%c7, %c0_29, %c0_30] : memref<12x4x1xf32, #tpu.memory_space<vmem>>, vector<1x4x1xf32>
    %68 = vector.shape_cast %67 : vector<1x4x1xf32> to vector<4x1xf32>
    %c6_31 = arith.constant 6 : index
    %c0_32 = arith.constant 0 : index
    %69 = vector.load %arg4[%c6_31, %c0_32] : memref<8x256xf32, #tpu.memory_space<vmem>>, vector<1x256xf32>
    %70 = vector.broadcast %68 : vector<4x1xf32> to vector<4x256xf32>
    %71 = vector.broadcast %69 : vector<1x256xf32> to vector<4x256xf32>
    %72 = arith.mulf %70, %71 : vector<4x256xf32>
    %73 = vector.shape_cast %72 : vector<4x256xf32> to vector<1x4x256xf32>
    %74 = arith.mulf %66, %73 : vector<1x4x256xf32>
    %75 = arith.addf %65, %74 : vector<1x4x256xf32>
    %c239_i32 = arith.constant 239 : i32
    %76 = tpu.dynamic_rotate %0 by %c239_i32 dim 2 : vector<1x4x256xf32>, i32 -> vector<1x4x256xf32>
    %c8 = arith.constant 8 : index
    %c0_33 = arith.constant 0 : index
    %c0_34 = arith.constant 0 : index
    %77 = vector.load %arg3[%c8, %c0_33, %c0_34] : memref<12x4x1xf32, #tpu.memory_space<vmem>>, vector<1x4x1xf32>
    %78 = vector.shape_cast %77 : vector<1x4x1xf32> to vector<4x1xf32>
    %c7_35 = arith.constant 7 : index
    %c0_36 = arith.constant 0 : index
    %79 = vector.load %arg4[%c7_35, %c0_36] : memref<8x256xf32, #tpu.memory_space<vmem>>, vector<1x256xf32>
    %80 = vector.broadcast %78 : vector<4x1xf32> to vector<4x256xf32>
    %81 = vector.broadcast %79 : vector<1x256xf32> to vector<4x256xf32>
    %82 = arith.mulf %80, %81 : vector<4x256xf32>
    %83 = vector.shape_cast %82 : vector<4x256xf32> to vector<1x4x256xf32>
    %84 = arith.mulf %76, %83 : vector<1x4x256xf32>
    %85 = arith.addf %75, %84 : vector<1x4x256xf32>
    %c9 = arith.constant 9 : index
    %c0_37 = arith.constant 0 : index
    %c0_38 = arith.constant 0 : index
    %86 = vector.load %arg3[%c9, %c0_37, %c0_38] : memref<12x4x1xf32, #tpu.memory_space<vmem>>, vector<1x4x1xf32>
    %87 = vector.shape_cast %86 : vector<1x4x1xf32> to vector<4x1xf32>
    %88 = vector.shape_cast %87 : vector<4x1xf32> to vector<1x4x1xf32>
    %89 = vector.broadcast %88 : vector<1x4x1xf32> to vector<1x4x256xf32>
    %90 = arith.addf %85, %89 : vector<1x4x256xf32>
    %cst = arith.constant 5.000000e-01 : f32
    %91 = vector.broadcast %cst : f32 to vector<1x4x256xf32>
    %92 = arith.mulf %91, %90 : vector<1x4x256xf32>
    %cst_39 = arith.constant 0.707106769 : f32
    %93 = vector.broadcast %cst_39 : f32 to vector<1x4x256xf32>
    %94 = arith.mulf %90, %93 : vector<1x4x256xf32>
    %95 = math.erf %94 : vector<1x4x256xf32>
    %cst_40 = arith.constant 1.000000e+00 : f32
    %96 = vector.broadcast %cst_40 : f32 to vector<1x4x256xf32>
    %97 = arith.addf %96, %95 : vector<1x4x256xf32>
    %98 = arith.mulf %92, %97 : vector<1x4x256xf32>
    %c10 = arith.constant 10 : index
    %c0_41 = arith.constant 0 : index
    %c0_42 = arith.constant 0 : index
    %99 = vector.load %arg3[%c10, %c0_41, %c0_42] : memref<12x4x1xf32, #tpu.memory_space<vmem>>, vector<1x4x1xf32>
    %100 = vector.shape_cast %99 : vector<1x4x1xf32> to vector<4x1xf32>
    %101 = vector.shape_cast %100 : vector<4x1xf32> to vector<1x4x1xf32>
    %102 = vector.broadcast %101 : vector<1x4x1xf32> to vector<1x4x256xf32>
    %103 = arith.mulf %98, %102 : vector<1x4x256xf32>
    %c11 = arith.constant 11 : index
    %c0_43 = arith.constant 0 : index
    %c0_44 = arith.constant 0 : index
    %104 = vector.load %arg3[%c11, %c0_43, %c0_44] : memref<12x4x1xf32, #tpu.memory_space<vmem>>, vector<1x4x1xf32>
    %105 = vector.shape_cast %104 : vector<1x4x1xf32> to vector<4x1xf32>
    %106 = vector.shape_cast %105 : vector<4x1xf32> to vector<1x4x1xf32>
    %107 = vector.broadcast %106 : vector<1x4x1xf32> to vector<1x4x256xf32>
    %108 = arith.addf %103, %107 : vector<1x4x256xf32>
    %c0_45 = arith.constant 0 : index
    %c0_46 = arith.constant 0 : index
    %c0_47 = arith.constant 0 : index
    %109 = vector.load %arg2[%c0_45, %c0_46, %c0_47] : memref<1x4x256xf32, #tpu.memory_space<vmem>>, vector<1x4x256xf32>
    %110 = arith.addf %108, %109 : vector<1x4x256xf32>
    %c0_48 = arith.constant 0 : index
    %c0_49 = arith.constant 0 : index
    %c0_50 = arith.constant 0 : index
    %111 = vector.load %arg5[%c0_48, %c0_49, %c0_50] : memref<1x4x256xf32, #tpu.memory_space<vmem>>, vector<1x4x256xf32>
    tpu.vector_store %arg5[%c0_48, %c0_49, %c0_50], %110 {strides = array<i32>} : memref<1x4x256xf32, #tpu.memory_space<vmem>>, vector<1x4x256xf32>,
    return
  }
  func.func @transform_0(%arg0: i32, %arg1: i32) -> (i32, i32, i32) {
    %c0_i32 = arith.constant 0 : i32
    %c0_i32_0 = arith.constant 0 : i32
    return %arg1, %arg0, %c0_i32 : i32, i32, i32
  }
  func.func @transform_1(%arg0: i32, %arg1: i32) -> (i32, i32, i32) {
    %c0_i32 = arith.constant 0 : i32
    %c0_i32_0 = arith.constant 0 : i32
    %c0_i32_1 = arith.constant 0 : i32
    return %c0_i32, %arg0, %c0_i32_0 : i32, i32, i32
  }
  func.func @transform_2(%arg0: i32, %arg1: i32) -> (i32, i32) {
    %c0_i32 = arith.constant 0 : i32
    %c0_i32_0 = arith.constant 0 : i32
    %c0_i32_1 = arith.constant 0 : i32
    return %c0_i32, %c0_i32_0 : i32, i32
  }
  func.func @transform_3(%arg0: i32, %arg1: i32) -> (i32, i32, i32) {
    %c0_i32 = arith.constant 0 : i32
    %c0_i32_0 = arith.constant 0 : i32
    return %arg1, %arg0, %c0_i32 : i32, i32, i32
  }
}

</mosaic_0001>

<llo_original>
// kernel: tpu_custom_call.1
$region0: #{tpu_custom_call.1}
  #allocation0 [shape = 'u32[]', space=smem, size = 0x4, offset = 0x4, fixed_abs, tag = 'smem constant byte address 0x4 - core index']
  #allocation1 [shape = 'u32[72,128]{1,0:T(1,128)}', space=vmem, size = 0x9000, scoped, tag = 'internal scratch']
  %s0 = inlined_call_operand.vmem [shape: f32[2,4,256], index: 0, kind: input, shape index: {}]
  %s1 = inlined_call_operand.vmem [shape: f32[12,4,1], index: 1, kind: input, shape index: {}]
  %s2 = inlined_call_operand.vmem [shape: f32[8,256], index: 2, kind: input, shape index: {}]
  %s3 = inlined_call_operand.hbm [shape: f32[2,4,256], index: 3, kind: output, shape index: {}]
  %s4 = sld [smem:[#allocation0]]
  $region45: #{tpu_custom_call.1} parent=0
    _
  %s6 = ssub.s32 1, %s4
  %s7 = scalar_select 0, %s6, %s4
  $region1: #{tpu_custom_call.1} parent=0
    #allocation2 [shape = 'u8[8192]{0}', space=vmem, size = 0x2000, scoped, tag = 'output window, operand 0']
    #allocation3 [shape = 's32[2]{0}', space=sflag, size = 0x8, scoped, tag = 'scoped memory for tpu_custom_call.1']
    %8 = vsyncpa [#allocation3], 0
    %s9 = scalar_lea.sflag [#allocation3], 1
    %10 = vsyncpa %s9, 0
    loop: start=0, step=1, limit=4
    $region2: #{tpu_custom_call.1} parent=1 // loop_pre_header
      _
    $region3: #{tpu_custom_call.1} parent=1 // loop_header
      %s12 = sphi 0, %s16
      %p13 = scmp.ge.s32.totalorder %s12, 4
      %s19 = sphi 0, %s31
      %s20 = sphi 0, %s27
      %s21 = sphi 0, %s19
      %s22 = sphi 0, %s20
      %s23 = sphi 0, %s21
      %s24 = sphi 0, %s22
      %s36 = sphi 0, %s38
      %s39 = sphi 0, %s36
      %s40 = sphi 0, %s39
      %s56 = sphi 0, %s40
      %s62 = sphi 0, %s64
      %s65 = sphi 0, %s62
      %s66 = sphi 0, %s65
      %s82 = sphi 0, %s66
      %s86 = sphi 0, %s86
      %s88 = sphi 0, %s86
      %s89 = sphi 0, %s88
      %s103 = sphi 0, %s89
      %s111 = sphi 0, %s113
      %s114 = sphi 0, %s111
      %s115 = sphi 0, %s114
      %s131 = sphi 0, %s115
    $region4: #{tpu_custom_call.1} parent=1 // loop_header_branch
      %15 = sbr.rel (%p13) target = $region8
    $region5: #{tpu_custom_call.1} parent=1 // loop_body
      %s17 = ssub.s32 %s12, 1
      %s18 = ssub.s32 %s12, 2
      %s25 = sadd.s32 1, %s20
      %p26 = scmp.ge.s32.totalorder %s25, 2
      %s27 = scalar_select %p26, 0, %s25
      %s28 = sadd.s32 1, %s19
      %s29 = scalar_select %p26, %s28, %s19
      %p30 = scmp.ge.s32.totalorder %s29, 1
      %s31 = scalar_select %p30, 0, %s29
      %s32 = ssub.s32 %s20, %s27
      %s33 = ssub.s32 %s19, %s31
      %s34 = sor.u32 %s32, %s33
      %p35 = scmp.eq.s32.totalorder %s34, 0
      %s37 = sadd.s32 %s36, 1
      %s38 = scalar_select %p35, %s36, %s37
      %p41 = pneg %p35
      %p42 = scmp.eq.s32.totalorder %s12, 1
      %p43 = por %p41, %p42
      %p44 = scmp.ne.s32.totalorder %s36, %s39
      %p45 = scmp.eq.s32.totalorder %s12, 0
      %p46 = por %p44, %p45
      %p47 = scmp.ne.s32.totalorder %s36, %s39
      %p48 = scmp.eq.s32.totalorder %s17, 1
      %p49 = por %p47, %p48
      %p50 = scmp.ne.s32.totalorder %s39, %s40
      %p51 = scmp.eq.s32.totalorder %s17, 0
      %p52 = por %p50, %p51
      %p53 = scmp.ne.s32.totalorder %s39, %s40
      %p54 = scmp.eq.s32.totalorder %s18, 1
      %p55 = por %p53, %p54
      %p57 = scmp.ne.s32.totalorder %s40, %s56
      %p58 = scmp.eq.s32.totalorder %s18, 0
      %p59 = por %p57, %p58
      %s60 = ssub.s32 %s19, %s31
      %p61 = scmp.eq.s32.totalorder %s60, 0
      %s63 = sadd.s32 %s62, 1
      %s64 = scalar_select %p61, %s62, %s63
      %p67 = pneg %p61
      %p68 = scmp.eq.s32.totalorder %s12, 1
      %p69 = por %p67, %p68
      %p70 = scmp.ne.s32.totalorder %s62, %s65
      %p71 = scmp.eq.s32.totalorder %s12, 0
      %p72 = por %p70, %p71
      %p73 = scmp.ne.s32.totalorder %s62, %s65
      %p74 = scmp.eq.s32.totalorder %s17, 1
      %p75 = por %p73, %p74
      %p76 = scmp.ne.s32.totalorder %s65, %s66
      %p77 = scmp.eq.s32.totalorder %s17, 0
      %p78 = por %p76, %p77
      %p79 = scmp.ne.s32.totalorder %s65, %s66
      %p80 = scmp.eq.s32.totalorder %s18, 1
      %p81 = por %p79, %p80
      %p83 = scmp.ne.s32.totalorder %s66, %s82
      %p84 = scmp.eq.s32.totalorder %s18, 0
      %p85 = por %p83, %p84
      %s87 = sadd.s32 %s86, 1
      %p90 = scmp.eq.s32.totalorder %s12, 1
      %p91 = scmp.ne.s32.totalorder %s86, %s88
      %p92 = scmp.eq.s32.totalorder %s12, 0
      %p93 = por %p91, %p92
      %p94 = scmp.ne.s32.totalorder %s86, %s88
      %p95 = scmp.eq.s32.totalorder %s17, 1
      %p96 = por %p94, %p95
      %p97 = scmp.ne.s32.totalorder %s88, %s89
      %p98 = scmp.eq.s32.totalorder %s17, 0
      %p99 = por %p97, %p98
      %p100 = scmp.ne.s32.totalorder %s88, %s89
      %p101 = scmp.eq.s32.totalorder %s18, 1
      %p102 = por %p100, %p101
      %p104 = scmp.ne.s32.totalorder %s89, %s103
      %p105 = scmp.eq.s32.totalorder %s18, 0
      %p106 = por %p104, %p105
      %s107 = ssub.s32 %s20, %s27
      %s108 = ssub.s32 %s19, %s31
      %s109 = sor.u32 %s107, %s108
      %p110 = scmp.eq.s32.totalorder %s109, 0
      %s112 = sadd.s32 %s111, 1
      %s113 = scalar_select %p110, %s111, %s112
      %p116 = pneg %p110
      %p117 = scmp.eq.s32.totalorder %s12, 1
      %p118 = por %p116, %p117
      %p119 = scmp.ne.s32.totalorder %s111, %s114
      %p120 = scmp.eq.s32.totalorder %s12, 0
      %p121 = por %p119, %p120
      %p122 = scmp.ne.s32.totalorder %s111, %s114
      %p123 = scmp.eq.s32.totalorder %s17, 1
      %p124 = por %p122, %p123
      %p125 = scmp.ne.s32.totalorder %s114, %s115
      %p126 = scmp.eq.s32.totalorder %s17, 0
      %p127 = por %p125, %p126
      %p128 = scmp.ne.s32.totalorder %s114, %s115
      %p129 = scmp.eq.s32.totalorder %s18, 1
      %p130 = por %p128, %p129
      %p132 = scmp.ne.s32.totalorder %s115, %s131
      %p133 = scmp.eq.s32.totalorder %s18, 0
      %p134 = por %p132, %p133
      %p135 = scmp.le.s32.totalorder 1, %s12
      %p136 = scmp.lt.s32.totalorder %s12, 3
      %p137 = pnand %p135, %p136
      %p138 = pneg %p137
      // Predicated region
      $region9: #{tpu_custom_call.1} parent=5 // pred_check
        _
      $region10: #{tpu_custom_call.1} parent=5 // pred_check_branch
        %140 = sbr.rel (%p137) target = $region12
      $region11: #{tpu_custom_call.1} parent=5 // pred_region
        %s141 = ssub.s32 %s12, 1
        // Predicated region
        $region13: #{tpu_custom_call.1} parent=11 // pred_check
          %p142 = pneg %p78
        $region14: #{tpu_custom_call.1} parent=11 // pred_check_branch
          %144 = sbr.rel (%p142) target = $region16
        $region15: #{tpu_custom_call.1} parent=11 // pred_region
          %p145 = scmp.lt.s32.totalorder %s21, 0
          %s146 = scalar_select %p145, %s21, 0
          %s147 = smul.addr %s146, 4
          %s148 = scalar_lea.vmem %s1, %s147
        $region16: #{tpu_custom_call.1} parent=11 // pred_fallthru
          _
        // Predicated region
        $region17: #{tpu_custom_call.1} parent=11 // pred_check
          %p149 = pneg %p99
        $region18: #{tpu_custom_call.1} parent=11 // pred_check_branch
          %151 = sbr.rel (%p149) target = $region20
        $region19: #{tpu_custom_call.1} parent=11 // pred_region
          _
        $region20: #{tpu_custom_call.1} parent=11 // pred_fallthru
          _
      $region12: #{tpu_custom_call.1} parent=5 // pred_fallthru
        _
      %p152 = scmp.lt.s32.totalorder %s12, 2
      // Predicated region
      $region21: #{tpu_custom_call.1} parent=5 // pred_check
        %p153 = pneg %p152
      $region22: #{tpu_custom_call.1} parent=5 // pred_check_branch
        %155 = sbr.rel (%p153) target = $region24
      $region23: #{tpu_custom_call.1} parent=5 // pred_region
        // Predicated region
        $region25: #{tpu_custom_call.1} parent=23 // pred_check
          %p156 = pneg %p46
        $region26: #{tpu_custom_call.1} parent=23 // pred_check_branch
          %158 = sbr.rel (%p156) target = $region28
        $region27: #{tpu_custom_call.1} parent=23 // pred_region
          %p159 = scmp.lt.s32.totalorder %s20, 1
          %s160 = scalar_select %p159, %s20, 1
          %p161 = scmp.lt.s32.totalorder %s19, 0
          %s162 = scalar_select %p161, %s19, 0
          %s163 = smul.addr %s162, 2
          %s164 = smul.addr %s160, 2
          %s165 = sadd.s32 %s163, %s164
          %s166 = smul.addr %s165, 4
          %s167 = scalar_lea.vmem %s0, %s166
        $region28: #{tpu_custom_call.1} parent=23 // pred_fallthru
          _
      $region24: #{tpu_custom_call.1} parent=5 // pred_fallthru
        _
      %p168 = scmp.le.s32.totalorder 1, %s12
      %p169 = scmp.lt.s32.totalorder %s12, 3
      %p170 = pnand %p168, %p169
      %p171 = pneg %p170
      // Predicated region
      $region29: #{tpu_custom_call.1} parent=5 // pred_check
        _
      $region30: #{tpu_custom_call.1} parent=5 // pred_check_branch
        %173 = sbr.rel (%p170) target = $region32
      $region31: #{tpu_custom_call.1} parent=5 // pred_region
        %s174 = ssub.s32 %s12, 1
        %p175 = scmp.lt.s32.totalorder %s22, 1
        %s176 = scalar_select %p175, %s22, 1
        %p177 = scmp.lt.s32.totalorder %s21, 0
        %s178 = scalar_select %p177, %s21, 0
        %s179 = smul.addr %s178, 2
        %s180 = smul.addr %s176, 2
        %s181 = sadd.s32 %s179, %s180
        %s182 = smul.addr %s181, 4
        %s183 = scalar_lea.vmem %s0, %s182
        %p184 = pneg %p52
        %p185 = pneg %p49
        %p186 = scmp.lt.s32.totalorder %s21, 0
        %s187 = scalar_select %p186, %s21, 0
        %s188 = smul.addr %s187, 4
        %s189 = scalar_lea.vmem %s1, %s188
        %p190 = pneg %p78
        %p191 = pneg %p75
        %p192 = pneg %p99
        %p193 = pneg %p96
        %p194 = pneg %p127
        %p195 = pneg %p124
        %s196 = sand.u32 %s114, 1
        %s197 = scalar_lea.sflag [#allocation3], %s196
        %s198 = sand.u32 %s114, 1
        %s199 = smul.addr %s198, 8
        %s200 = scalar_lea.vmem [#allocation2], %s199
        %p201 = scmp.lt.s32.totalorder %s22, 1
        %s202 = scalar_select %p201, %s22, 1
        %p203 = scmp.lt.s32.totalorder %s21, 0
        %s204 = scalar_select %p203, %s21, 0
        %s205 = smul.addr %s204, 2
        %s206 = smul.addr %s202, 2
        %s207 = sadd.s32 %s205, %s206
        %s208 = smul.addr %s207, 4
        %s209 = scalar_lea.vmem %s0, %s208
        %p210 = scmp.lt.s32.totalorder %s21, 0
        %s211 = scalar_select %p210, %s21, 0
        %s212 = smul.addr %s211, 4
        %s213 = scalar_lea.vmem %s1, %s212
        %v214 = vld [vmem:[%s209] sm:$0xff]
        %216 = vst [vmem:[#allocation1] ss:$2 sm:$0xff] %v214
        %v217 = vld.sshfl [vmem:[#allocation1] sm:$0xff pattern:$0x75316420]
        %v218 = vld.sshfl [vmem:[#allocation1 + $0x8] sm:$0xff pattern:$0x75316420]
        %221 = vrot.lane.b32.xlu0 %v217, 17
        %v222 = vpop.permute.xlu0 %221
        %223 = vrot.lane.b32.xlu0 %v218, 17
        %v224 = vpop.permute.xlu0 %223
        %v225 = vlaneseq
        %v226 = vand.u32 %v225, 127
        %vm227 = vcmp.lt.s32.totalorder %v226, 17
        %v228 = vsel %vm227, %v222, %v224
        %v229 = vsel %vm227, %v224, %v222
        %v230 = vld [vmem:[%s213] sm:$0xf]
        %v231 = vld [vmem:[%s2] ss:$8 sm:$0x3]
        %233 = vset.pattern.permute.xlu0 0
        %234 = vperm.xlu0 %233, %v230
        %v235 = vpop.permute.xlu0 %234
        %v238 = vperm.slane %v231, 0
        %v239 = vperm.slane %v231, 1
        %v242 = vmul.f32 %v235, %v238
        %v243 = vmul.f32 %v235, %v239
        %v244 = vmul.f32 %v229, %v242
        %v245 = vmul.f32 %v228, %v243
        %246 = vst [vmem:[#allocation1] ss:$2 sm:$0xff] %v214
        %v247 = vld.sshfl [vmem:[#allocation1] sm:$0xff pattern:$0x75316420]
        %v248 = vld.sshfl [vmem:[#allocation1 + $0x8] sm:$0xff pattern:$0x75316420]
        %251 = vrot.lane.b32.xlu0 %v247, 16
        %v252 = vpop.permute.xlu0 %251
        %253 = vrot.lane.b32.xlu0 %v248, 16
        %v254 = vpop.permute.xlu0 %253
        %vm255 = vcmp.lt.s32.totalorder %v226, 16
        %v256 = vsel %vm255, %v252, %v254
        %v257 = vsel %vm255, %v254, %v252
        %s258 = scalar_lea.vmem %s213, 4
        %v259 = vld [vmem:[%s258] sm:$0xf]
        %s260 = scalar_lea.vmem %s2, 1
        %v261 = vld [vmem:[%s260] ss:$8 sm:$0x3]
        %263 = vset.pattern.permute.xlu0 0
        %264 = vperm.xlu0 %263, %v259
        %v265 = vpop.permute.xlu0 %264
        %v268 = vperm.slane %v261, 0
        %v269 = vperm.slane %v261, 1
        %v272 = vmul.f32 %v265, %v268
        %v273 = vmul.f32 %v265, %v269
        %v274 = vmul.f32 %v257, %v272
        %v275 = vmul.f32 %v256, %v273
        %v276 = vadd.f32 %v244, %v274
        %v277 = vadd.f32 %v245, %v275
        %278 = vst [vmem:[#allocation1] ss:$2 sm:$0xff] %v214
        %v279 = vld.sshfl [vmem:[#allocation1] sm:$0xff pattern:$0x75316420]
        %v280 = vld.sshfl [vmem:[#allocation1 + $0x8] sm:$0xff pattern:$0x75316420]
        %283 = vrot.lane.b32.xlu0 %v279, 15
        %v284 = vpop.permute.xlu0 %283
        %285 = vrot.lane.b32.xlu0 %v280, 15
        %v286 = vpop.permute.xlu0 %285
        %vm287 = vcmp.lt.s32.totalorder %v226, 15
        %v288 = vsel %vm287, %v284, %v286
        %v289 = vsel %vm287, %v286, %v284
        %s290 = scalar_lea.vmem %s213, 8
        %v291 = vld [vmem:[%s290] sm:$0xf]
        %s292 = scalar_lea.vmem %s2, 2
        %v293 = vld [vmem:[%s292] ss:$8 sm:$0x3]
        %295 = vset.pattern.permute.xlu0 0
        %296 = vperm.xlu0 %295, %v291
        %v297 = vpop.permute.xlu0 %296
        %v300 = vperm.slane %v293, 0
        %v301 = vperm.slane %v293, 1
        %v304 = vmul.f32 %v297, %v300
        %v305 = vmul.f32 %v297, %v301
        %v306 = vmul.f32 %v289, %v304
        %v307 = vmul.f32 %v288, %v305
        %v308 = vadd.f32 %v276, %v306
        %v309 = vadd.f32 %v277, %v307
        %310 = vst [vmem:[#allocation1] ss:$2 sm:$0xff] %v214
        %v311 = vld.sshfl [vmem:[#allocation1] sm:$0xff pattern:$0x75316420]
        %v312 = vld.sshfl [vmem:[#allocation1 + $0x8] sm:$0xff pattern:$0x75316420]
        %315 = vrot.lane.b32.xlu0 %v311, 1
        %v316 = vpop.permute.xlu0 %315
        %317 = vrot.lane.b32.xlu0 %v312, 1
        %v318 = vpop.permute.xlu0 %317
        %vm319 = vcmp.lt.s32.totalorder %v226, 1
        %v320 = vsel %vm319, %v316, %v318
        %v321 = vsel %vm319, %v318, %v316
        %s322 = scalar_lea.vmem %s213, 12
        %v323 = vld [vmem:[%s322] sm:$0xf]
        %s324 = scalar_lea.vmem %s2, 3
        %v325 = vld [vmem:[%s324] ss:$8 sm:$0x3]
        %327 = vset.pattern.permute.xlu0 0
        %328 = vperm.xlu0 %327, %v323
        %v329 = vpop.permute.xlu0 %328
        %v332 = vperm.slane %v325, 0
        %v333 = vperm.slane %v325, 1
        %v336 = vmul.f32 %v329, %v332
        %v337 = vmul.f32 %v329, %v333
        %v338 = vmul.f32 %v321, %v336
        %v339 = vmul.f32 %v320, %v337
        %v340 = vadd.f32 %v308, %v338
        %v341 = vadd.f32 %v309, %v339
        %s342 = scalar_lea.vmem %s213, 16
        %v343 = vld [vmem:[%s342] sm:$0xf]
        %345 = vset.pattern.permute.xlu0 0
        %346 = vperm.xlu0 %345, %v343
        %v347 = vpop.permute.xlu0 %346
        %v349 = vunpack.c.l.s4 839922192
        %v350 = vunpack.c.0.s8 %v349
        %v351 = vperm.slane %v347, %v350
        %v353 = vmul.f32 %v214, %v351
        %355 = vst [vmem:[#allocation1] ss:$2 sm:$0xff] %v353
        %v356 = vld.sshfl [vmem:[#allocation1] sm:$0xff pattern:$0x75316420]
        %v357 = vld.sshfl [vmem:[#allocation1 + $0x8] sm:$0xff pattern:$0x75316420]
        %v360 = vadd.f32 %v340, %v356
        %v361 = vadd.f32 %v341, %v357
        %362 = vst [vmem:[#allocation1] ss:$2 sm:$0xff] %v214
        %v363 = vld.sshfl [vmem:[#allocation1] sm:$0xff pattern:$0x75316420]
        %v364 = vld.sshfl [vmem:[#allocation1 + $0x8] sm:$0xff pattern:$0x75316420]
        %367 = vrot.lane.b32.xlu0 %v363, 127
        %v368 = vpop.permute.xlu0 %367
        %369 = vrot.lane.b32.xlu0 %v364, 127
        %v370 = vpop.permute.xlu0 %369
        %vm371 = vcmp.lt.s32.totalorder %v226, 127
        %v372 = vsel %vm371, %v368, %v370
        %v373 = vsel %vm371, %v370, %v368
        %s374 = scalar_lea.vmem %s213, 20
        %v375 = vld [vmem:[%s374] sm:$0xf]
        %s376 = scalar_lea.vmem %s2, 4
        %v377 = vld [vmem:[%s376] ss:$8 sm:$0x3]
        %379 = vset.pattern.permute.xlu0 0
        %380 = vperm.xlu0 %379, %v375
        %v381 = vpop.permute.xlu0 %380
        %v384 = vperm.slane %v377, 0
        %v385 = vperm.slane %v377, 1
        %v388 = vmul.f32 %v381, %v384
        %v389 = vmul.f32 %v381, %v385
        %v390 = vmul.f32 %v372, %v388
        %v391 = vmul.f32 %v373, %v389
        %v392 = vadd.f32 %v360, %v390
        %v393 = vadd.f32 %v361, %v391
        %394 = vst [vmem:[#allocation1] ss:$2 sm:$0xff] %v214
        %v395 = vld.sshfl [vmem:[#allocation1] sm:$0xff pattern:$0x75316420]
        %v396 = vld.sshfl [vmem:[#allocation1 + $0x8] sm:$0xff pattern:$0x75316420]
        %399 = vrot.lane.b32.xlu0 %v395, 113
        %v400 = vpop.permute.xlu0 %399
        %401 = vrot.lane.b32.xlu0 %v396, 113
        %v402 = vpop.permute.xlu0 %401
        %vm403 = vcmp.lt.s32.totalorder %v226, 113
        %v404 = vsel %vm403, %v400, %v402
        %v405 = vsel %vm403, %v402, %v400
        %s406 = scalar_lea.vmem %s213, 24
        %v407 = vld [vmem:[%s406] sm:$0xf]
        %s408 = scalar_lea.vmem %s2, 5
        %v409 = vld [vmem:[%s408] ss:$8 sm:$0x3]
        %411 = vset.pattern.permute.xlu0 0
        %412 = vperm.xlu0 %411, %v407
        %v413 = vpop.permute.xlu0 %412
        %v416 = vperm.slane %v409, 0
        %v417 = vperm.slane %v409, 1
        %v420 = vmul.f32 %v413, %v416
        %v421 = vmul.f32 %v413, %v417
        %v422 = vmul.f32 %v404, %v420
        %v423 = vmul.f32 %v405, %v421
        %v424 = vadd.f32 %v392, %v422
        %v425 = vadd.f32 %v393, %v423
        %426 = vst [vmem:[#allocation1] ss:$2 sm:$0xff] %v214
        %v427 = vld.sshfl [vmem:[#allocation1] sm:$0xff pattern:$0x75316420]
        %v428 = vld.sshfl [vmem:[#allocation1 + $0x8] sm:$0xff pattern:$0x75316420]
        %431 = vrot.lane.b32.xlu0 %v427, 112
        %v432 = vpop.permute.xlu0 %431
        %433 = vrot.lane.b32.xlu0 %v428, 112
        %v434 = vpop.permute.xlu0 %433
        %vm435 = vcmp.lt.s32.totalorder %v226, 112
        %v436 = vsel %vm435, %v432, %v434
        %v437 = vsel %vm435, %v434, %v432
        %s438 = scalar_lea.vmem %s213, 28
        %v439 = vld [vmem:[%s438] sm:$0xf]
        %s440 = scalar_lea.vmem %s2, 6
        %v441 = vld [vmem:[%s440] ss:$8 sm:$0x3]
        %443 = vset.pattern.permute.xlu0 0
        %444 = vperm.xlu0 %443, %v439
        %v445 = vpop.permute.xlu0 %444
        %v448 = vperm.slane %v441, 0
        %v449 = vperm.slane %v441, 1
        %v452 = vmul.f32 %v445, %v448
        %v453 = vmul.f32 %v445, %v449
        %v454 = vmul.f32 %v436, %v452
        %v455 = vmul.f32 %v437, %v453
        %v456 = vadd.f32 %v424, %v454
        %v457 = vadd.f32 %v425, %v455
        %458 = vst [vmem:[#allocation1] ss:$2 sm:$0xff] %v214
        %v459 = vld.sshfl [vmem:[#allocation1] sm:$0xff pattern:$0x75316420]
        %v460 = vld.sshfl [vmem:[#allocation1 + $0x8] sm:$0xff pattern:$0x75316420]
        %463 = vrot.lane.b32.xlu0 %v459, 111
        %v464 = vpop.permute.xlu0 %463
        %465 = vrot.lane.b32.xlu0 %v460, 111
        %v466 = vpop.permute.xlu0 %465
        %vm467 = vcmp.lt.s32.totalorder %v226, 111
        %v468 = vsel %vm467, %v464, %v466
        %v469 = vsel %vm467, %v466, %v464
        %s470 = scalar_lea.vmem %s213, 32
        %v471 = vld [vmem:[%s470] sm:$0xf]
        %s472 = scalar_lea.vmem %s2, 7
        %v473 = vld [vmem:[%s472] ss:$8 sm:$0x3]
        %475 = vset.pattern.permute.xlu0 0
        %476 = vperm.xlu0 %475, %v471
        %v477 = vpop.permute.xlu0 %476
        %v480 = vperm.slane %v473, 0
        %v481 = vperm.slane %v473, 1
        %v484 = vmul.f32 %v477, %v480
        %v485 = vmul.f32 %v477, %v481
        %v486 = vmul.f32 %v468, %v484
        %v487 = vmul.f32 %v469, %v485
        %v488 = vadd.f32 %v456, %v486
        %v489 = vadd.f32 %v457, %v487
        %s490 = scalar_lea.vmem %s213, 36
        %v491 = vld [vmem:[%s490] sm:$0xf]
        %493 = vset.pattern.permute.xlu0 0
        %494 = vperm.xlu0 %493, %v491
        %v495 = vpop.permute.xlu0 %494
        %v497 = vadd.f32 %v488, %v495
        %v498 = vadd.f32 %v489, %v495
        %v499 = vmul.f32 %v497, 0.5
        %v500 = vmul.f32 %v498, 0.5
        %v501 = vmul.f32 %v497, 0.70710677
        %v502 = vmul.f32 %v498, 0.70710677
        %v503 = vmul.f32 %v501, %v501
        %v504 = vmin.f32 16.0, %v503
        %v505 = vmul.f32 %v504, 2.1237322e-06
        %v506 = vadd.f32 %v505, 0.00028619796
        %v507 = vmul.f32 %v504, %v506
        %v508 = vadd.f32 %v507, 0.0036580483
        %v509 = vmul.f32 %v504, %v508
        %v510 = vadd.f32 %v509, 0.05243302
        %v511 = vmul.f32 %v504, %v510
        %v512 = vadd.f32 %v511, 0.18741608
        %v513 = vmul.f32 %v504, %v512
        %v514 = vadd.f32 %v513, 1.1283791
        %v515 = vmul.f32 %v501, %v514
        %v516 = vmul.f32 %v504, 3.8918573e-05
        %v517 = vadd.f32 %v516, 0.001143296
        %v518 = vmul.f32 %v504, %v517
        %v519 = vadd.f32 %v518, 0.014752088
        %v520 = vmul.f32 %v504, %v519
        %v521 = vadd.f32 %v520, 0.112945676
        %v522 = vmul.f32 %v504, %v521
        %v523 = vadd.f32 %v522, 0.4994258
        %v524 = vmul.f32 %v504, %v523
        %v525 = vadd.f32 %v524, 1.0
        %v526 = vrcp.pop %v525
        %v527 = vmul.f32 %v525, %v526
        %v528 = vsub.f32 1.0, %v527
        %v529 = vmul.f32 %v526, %v528
        %v530 = vadd.f32 %v526, %v529
        %vm531 = vweird.f32 %v525
        %vm532 = vweird.f32 %v526
        %vm533 = vmor %vm531, %vm532
        %v534 = vsel %vm533, %v526, %v530
        %v535 = vand.u32 2147483647, %v525
        %vm536 = vcmp.eq.f32.partialorder %v535, 8.507059e+37
        %v537 = vand.u32 %v525, 2147483648
        %v538 = vor.u32 1.1754944e-38, %v537
        %v539 = vsel %vm536, %v538, %v534
        %v540 = vmul.f32 %v515, %v539
        %v541 = vmin.f32 %v540, 1.0
        %v542 = vmax.f32 %v541, -1.0
        %v543 = vmul.f32 %v502, %v502
        %v544 = vmin.f32 16.0, %v543
        %v545 = vmul.f32 %v544, 2.1237322e-06
        %v546 = vadd.f32 %v545, 0.00028619796
        %v547 = vmul.f32 %v544, %v546
        %v548 = vadd.f32 %v547, 0.0036580483
        %v549 = vmul.f32 %v544, %v548
        %v550 = vadd.f32 %v549, 0.05243302
        %v551 = vmul.f32 %v544, %v550
        %v552 = vadd.f32 %v551, 0.18741608
        %v553 = vmul.f32 %v544, %v552
        %v554 = vadd.f32 %v553, 1.1283791
        %v555 = vmul.f32 %v502, %v554
        %v556 = vmul.f32 %v544, 3.8918573e-05
        %v557 = vadd.f32 %v556, 0.001143296
        %v558 = vmul.f32 %v544, %v557
        %v559 = vadd.f32 %v558, 0.014752088
        %v560 = vmul.f32 %v544, %v559
        %v561 = vadd.f32 %v560, 0.112945676
        %v562 = vmul.f32 %v544, %v561
        %v563 = vadd.f32 %v562, 0.4994258
        %v564 = vmul.f32 %v544, %v563
        %v565 = vadd.f32 %v564, 1.0
        %v566 = vrcp.pop %v565
        %v567 = vmul.f32 %v565, %v566
        %v568 = vsub.f32 1.0, %v567
        %v569 = vmul.f32 %v566, %v568
        %v570 = vadd.f32 %v566, %v569
        %vm571 = vweird.f32 %v565
        %vm572 = vweird.f32 %v566
        %vm573 = vmor %vm571, %vm572
        %v574 = vsel %vm573, %v566, %v570
        %v575 = vand.u32 2147483647, %v565
        %vm576 = vcmp.eq.f32.partialorder %v575, 8.507059e+37
        %v577 = vand.u32 %v565, 2147483648
        %v578 = vor.u32 1.1754944e-38, %v577
        %v579 = vsel %vm576, %v578, %v574
        %v580 = vmul.f32 %v555, %v579
        %v581 = vmin.f32 %v580, 1.0
        %v582 = vmax.f32 %v581, -1.0
        %v583 = vadd.f32 %v542, 1.0
        %v584 = vadd.f32 %v582, 1.0
        %v585 = vmul.f32 %v499, %v583
        %v586 = vmul.f32 %v500, %v584
        %s587 = scalar_lea.vmem %s213, 40
        %v588 = vld [vmem:[%s587] sm:$0xf]
        %590 = vset.pattern.permute.xlu0 0
        %591 = vperm.xlu0 %590, %v588
        %v592 = vpop.permute.xlu0 %591
        %v594 = vmul.f32 %v585, %v592
        %v595 = vmul.f32 %v586, %v592
        %s596 = scalar_lea.vmem %s213, 44
        %v597 = vld [vmem:[%s596] sm:$0xf]
        %599 = vset.pattern.permute.xlu0 0
        %600 = vperm.xlu0 %599, %v597
        %v601 = vpop.permute.xlu0 %600
        %v603 = vadd.f32 %v594, %v601
        %v604 = vadd.f32 %v595, %v601
        %605 = vst [vmem:[#allocation1] ss:$2 sm:$0xff] %v214
        %v606 = vld.sshfl [vmem:[#allocation1] sm:$0xff pattern:$0x75316420]
        %v607 = vld.sshfl [vmem:[#allocation1 + $0x8] sm:$0xff pattern:$0x75316420]
        %v610 = vadd.f32 %v603, %v606
        %v611 = vadd.f32 %v604, %v607
        %v614 = vrot.slane %v611, 4
        %vm615 = vcmask 1043456
        %v616 = vsel %vm615, %v610, %v614
        %618 = vst [vmem:[%s200] sm:$0xff] %v616
        %s619 = sand.u32 %s114, 1
        %s620 = scalar_lea.sflag [#allocation3], %s619
        %s621 = sand.u32 %s114, 1
        %s622 = smul.addr %s621, 8
        %s623 = scalar_lea.vmem [#allocation2], %s622
        // Predicated region
        $region33: #{tpu_custom_call.1} parent=31 // pred_check
          %p624 = pneg %p124
        $region34: #{tpu_custom_call.1} parent=31 // pred_check_branch
          %626 = sbr.rel (%p624) target = $region36
        $region35: #{tpu_custom_call.1} parent=31 // pred_region
          %628 = vsyncadd %s620, 0
          %s629 = smul.addr %s21, 2
          %s630 = smul.addr %s22, 2
          %s631 = sadd.s32 %s629, %s630
          %s632 = smul.addr %s631, 4
          %s633 = scalar_lea.hbm %s3, %s632
          %s635 = sshll.u32 %s623, 4
          %s636 = int_to_ptr.vmem [resolvable:$true] %s635
          %s637 = sshll.u32 %s633, 4
          %s638 = int_to_ptr.hbm [resolvable:$true] %s637
          %640 = dma.vmem_to_hbm [thread:$0]  %s636, 128, %s638, %s620
        $region36: #{tpu_custom_call.1} parent=31 // pred_fallthru
          _
      $region32: #{tpu_custom_call.1} parent=5 // pred_fallthru
        _
      %p641 = scmp.le.s32.totalorder 2, %s12
      // Predicated region
      $region37: #{tpu_custom_call.1} parent=5 // pred_check
        %p642 = pneg %p641
      $region38: #{tpu_custom_call.1} parent=5 // pred_check_branch
        %644 = sbr.rel (%p642) target = $region40
      $region39: #{tpu_custom_call.1} parent=5 // pred_region
        %s645 = ssub.s32 %s12, 2
        // Predicated region
        $region41: #{tpu_custom_call.1} parent=39 // pred_check
          %p646 = pneg %p130
        $region42: #{tpu_custom_call.1} parent=39 // pred_check_branch
          %648 = sbr.rel (%p646) target = $region44
        $region43: #{tpu_custom_call.1} parent=39 // pred_region
          %s649 = sand.u32 %s115, 1
          %s650 = scalar_lea.sflag [#allocation3], %s649
          %s651 = sand.u32 %s115, 1
          %s652 = smul.addr %s651, 8
          %s653 = scalar_lea.vmem [#allocation2], %s652
          %655 = dma.done %s650, 128
        $region44: #{tpu_custom_call.1} parent=39 // pred_fallthru
          _
      $region40: #{tpu_custom_call.1} parent=5 // pred_fallthru
        _
    $region6: #{tpu_custom_call.1} parent=1 // loop_footer
      %s16 = sadd.s32 1, %s12
    $region7: #{tpu_custom_call.1} parent=1 // loop_footer_branch
      %11 = sbr.rel target = $region3
    $region8: #{tpu_custom_call.1} parent=1 // loop_exit
      _
    %656 = vsyncpa [#allocation3], 1
    %s657 = scalar_lea.sflag [#allocation3], 1
    %658 = vsyncpa %s657, 1

</llo_original>
